<compile_context>
chip_gen: v7x
topology: tpu7x:2x2x1
jax: 0.10.0
libtpu: 0.0.40
codegen_flags: <defaults>
</compile_context>

<pallas_src>
import jax
import jax.numpy as jnp
from jax.experimental import pallas as pl
from jax.experimental.pallas import tpu as pltpu

NUM_NEURONS = 256
MAX_TB = 512   # max batch tile; (256, 512) f32 activations ~0.5 MiB, far under VMEM


def _valuenet_kernel(xT_ref, w1_ref, b1_ref, w2_ref, b2_ref, w3_ref, b3_ref, o_ref):
    # Input tile, feature-major (K_pad, TB); cast to bf16 only at the MXU input
    # (bias-add / ReLU stay f32, so no bf16 VPU penalty on v5e).
    x_bf = xT_ref[...].astype(jnp.bfloat16)

    # fc1: (256, K_pad) @ (K_pad, TB) on the MXU (K zero-padded to one sublane tile).
    h1 = jnp.dot(w1_ref[...], x_bf, preferred_element_type=jnp.float32)
    h1 = jnp.maximum(h1 + b1_ref[...], 0.0)                      # (256, TB) f32

    # fc2: (256, 256) @ (256, TB) on the MXU, f32 accumulate.
    h2 = jnp.dot(w2_ref[...], h1.astype(jnp.bfloat16),
                 preferred_element_type=jnp.float32)
    h2 = jnp.maximum(h2 + b2_ref[...], 0.0)                      # (256, TB) f32

    # fc3: replace the N=1 matmul with a VPU multiply + cross-sublane (XLU)
    # reduction, producing a lane-dense (1, TB) row instead of a masked (TB, 1).
    y = jnp.sum(h2 * w3_ref[...], axis=0, keepdims=True)         # (1, TB)
    o_ref[...] = (y + b3_ref[0, 0]).astype(o_ref.dtype)          # b3 scalar from SMEM


def value_net_forward(x, params):
    """Fused ValueNet forward.  x: (B, num_inputs) f32.  Returns (B, 1) f32."""
    w1, b1, w2, b2, w3, b3 = params
    B, K = x.shape
    k_pad = w1.shape[1]

    # Adaptive batch tile: as large as possible (up to MAX_TB) so per-grid-step
    # overhead is amortized, but no bigger than the 128-rounded batch.
    b_pad128 = ((B + 127) // 128) * 128
    TB = min(MAX_TB, b_pad128)
    b_pad = ((B + TB - 1) // TB) * TB
    num_tiles = b_pad // TB

    # Feature-major, zero-padded input slab (wrapper-side layout plumbing only).
    xT = jnp.zeros((k_pad, b_pad), jnp.float32).at[:K, :B].set(x.T)

    resident = lambda a: pl.BlockSpec(a.shape, lambda i: (0, 0))

    flops = 2 * b_pad * (k_pad * NUM_NEURONS + NUM_NEURONS * NUM_NEURONS + NUM_NEURONS)
    bytes_accessed = (
        xT.size * 4 + b_pad * 4                      # streamed activations in/out
        + (w1.size + w2.size) * 2 + w3.size * 4      # resident weights (loaded once)
        + (b1.size + b2.size + b3.size) * 4)         # resident f32 biases (once)

    out = pl.pallas_call(
        _valuenet_kernel,
        out_shape=jax.ShapeDtypeStruct((1, b_pad), jnp.float32),
        grid=(num_tiles,),
        in_specs=[
            pl.BlockSpec((k_pad, TB), lambda i: (0, i)),           # x tiles: pipelined
            resident(w1), resident(b1),                            # VMEM-resident weights
            resident(w2), resident(b2),
            resident(w3),
            pl.BlockSpec(memory_space=pltpu.MemorySpace.SMEM),     # b3 (1,1) scalar
        ],
        out_specs=pl.BlockSpec((1, TB), lambda i: (0, i)),         # lane-dense output row
        compiler_params=pltpu.CompilerParams(
            dimension_semantics=("parallel",)),
        cost_estimate=pl.CostEstimate(
            flops=flops, transcendentals=0, bytes_accessed=bytes_accessed),
    )(xT, w1, b1, w2, b2, w3, b3)

    return out[0, :B].reshape(B, 1)


def init_params(key, num_inputs):
    """nn.Linear-style U(-1/sqrt(fan_in), 1/sqrt(fan_in)) init, packed for the kernel:
    fc1/fc2 weights in PyTorch (out, in) order cast to bf16 (MXU fast path), fc1 K
    zero-padded to a sublane tile, fc3 weight as an f32 (out_dim, 1) column (used on
    the VPU, not the MXU), biases as f32 (out, 1) columns, b3 as a (1, 1) SMEM scalar."""
    k_pad = max(8, ((num_inputs + 7) // 8) * 8)
    ks = jax.random.split(key, 6)

    def linear(kw, kb, fan_in, fan_out):
        bound = 1.0 / (float(fan_in) ** 0.5)
        w = jax.random.uniform(kw, (fan_out, fan_in), jnp.float32, -bound, bound)
        b = jax.random.uniform(kb, (fan_out,), jnp.float32, -bound, bound)
        return w, b

    w1, b1 = linear(ks[0], ks[1], num_inputs, NUM_NEURONS)
    w2, b2 = linear(ks[2], ks[3], NUM_NEURONS, NUM_NEURONS)
    w3, b3 = linear(ks[4], ks[5], NUM_NEURONS, 1)

    w1_k = jnp.zeros((NUM_NEURONS, k_pad), jnp.bfloat16).at[:, :num_inputs].set(
        w1.astype(jnp.bfloat16))
    b1_k = b1.reshape(NUM_NEURONS, 1)
    w2_k = w2.astype(jnp.bfloat16)
    b2_k = b2.reshape(NUM_NEURONS, 1)
    w3_k = w3.T.astype(jnp.float32)             # (NUM_NEURONS, 1), stays f32 (VPU path)
    b3_k = b3.reshape(1, 1)
    return (w1_k, b1_k, w2_k, b2_k, w3_k, b3_k)


def value_net_ref(x, params):
    """Pure-JAX reference using the same bf16-at-MXU-input recipe as the kernel."""
    w1, b1, w2, b2, w3, b3 = params
    K = x.shape[1]
    xb = x.astype(jnp.bfloat16)
    h1 = jnp.dot(xb, w1[:, :K].T, preferred_element_type=jnp.float32) + b1[:, 0]
    h1 = jnp.maximum(h1, 0.0)
    h2 = jnp.dot(h1.astype(jnp.bfloat16), w2.T,
                 preferred_element_type=jnp.float32) + b2[:, 0]
    h2 = jnp.maximum(h2, 0.0)
    return h2 @ w3 + b3[0, 0]                   # (B, 1)


if __name__ == "__main__":
    key = jax.random.PRNGKey(0)
    k_param, k_x1, k_x2 = jax.random.split(key, 3)

    num_inputs = 4   # CartPole-like state dim implied by add_noise_to_target
    params = init_params(k_param, num_inputs)

    # Small demo batch (adaptive tile: single TB=128 grid step).
    x = jax.random.normal(k_x1, (8, num_inputs), jnp.float32)
    out = jax.block_until_ready(value_net_forward(x, params))
    ref = value_net_ref(x, params)
    assert out.shape == (8, 1)
    assert jnp.allclose(out, ref, atol=1e-3, rtol=1e-3), "mismatch vs reference (B=8)"

    # Batch larger than MAX_TB to exercise the multi-tile pipelined grid + padding path.
    x2 = jax.random.normal(k_x2, (600, num_inputs), jnp.float32)
    out2 = jax.block_until_ready(value_net_forward(x2, params))
    ref2 = value_net_ref(x2, params)
    assert out2.shape == (600, 1)
    assert jnp.allclose(out2, ref2, atol=1e-3, rtol=1e-3), "mismatch vs reference (B=600)"

    # TODO(synk): add_noise_to_target (torch.normal noise injection) is a
    # training-time helper, not part of forward(); not implemented in-kernel.
    print("KERNEL_OK")
</pallas_src>

<mosaic_0001>
module attributes {stable_mosaic.version = 11 : i64} {
  func.func @_valuenet_kernel(%arg0: i32, %arg1: memref<8x128xf32, #tpu.memory_space<vmem>>, %arg2: memref<256x8xbf16, #tpu.memory_space<vmem>>, %arg3: memref<256x1xf32, #tpu.memory_space<vmem>>, %arg4: memref<256x256xbf16, #tpu.memory_space<vmem>>, %arg5: memref<256x1xf32, #tpu.memory_space<vmem>>, %arg6: memref<256x1xf32, #tpu.memory_space<vmem>>, %arg7: memref<1x1xf32, #tpu.memory_space<smem>>, %arg8: memref<1x128xf32, #tpu.memory_space<vmem>>) attributes {dimension_semantics = [#tpu.dimension_semantics<parallel>], iteration_bounds = array<i64: 1>, scalar_prefetch = 0 : i64, scratch_operands = 0 : i64, tpu.core_type = #tpu.core_type<tc>, window_params = [{transform_indices = @transform_0, window_bounds = array<i64: 8, 128>}, {pipeline_mode = #tpu.pipeline_mode<synchronous>, transform_indices = @transform_1, window_bounds = array<i64: 256, 8>}, {pipeline_mode = #tpu.pipeline_mode<synchronous>, transform_indices = @transform_2, window_bounds = array<i64: 256, 1>}, {pipeline_mode = #tpu.pipeline_mode<synchronous>, transform_indices = @transform_3, window_bounds = array<i64: 256, 256>}, {pipeline_mode = #tpu.pipeline_mode<synchronous>, transform_indices = @transform_4, window_bounds = array<i64: 256, 1>}, {pipeline_mode = #tpu.pipeline_mode<synchronous>, transform_indices = @transform_5, window_bounds = array<i64: 256, 1>}, {transform_indices = @transform_6, window_bounds = array<i64: 1, 1>}, {transform_indices = @transform_7, window_bounds = array<i64: 1, 128>}]} {
    %c0 = arith.constant 0 : index
    %c0_0 = arith.constant 0 : index
    %0 = vector.load %arg1[%c0, %c0_0] : memref<8x128xf32, #tpu.memory_space<vmem>>, vector<8x128xf32>
    %1 = arith.truncf %0 : vector<8x128xf32> to vector<8x128xbf16>
    %c0_1 = arith.constant 0 : index
    %c0_2 = arith.constant 0 : index
    %2 = vector.load %arg2[%c0_1, %c0_2] : memref<256x8xbf16, #tpu.memory_space<vmem>>, vector<256x8xbf16>
    %cst = arith.constant dense<0.000000e+00> : vector<256x128xf32>
    %3 = tpu.matmul %2, %1, %cst {dimension_numbers = #tpu.dot_dimension_numbers<[1], [0], [0], [1], [0, 0, 1, 1], [], []>} : vector<256x8xbf16>, vector<8x128xbf16>, vector<256x128xf32> -> vector<256x128xf32>
    %c0_3 = arith.constant 0 : index
    %c0_4 = arith.constant 0 : index
    %4 = vector.load %arg3[%c0_3, %c0_4] : memref<256x1xf32, #tpu.memory_space<vmem>>, vector<256x1xf32>
    %5 = vector.broadcast %4 : vector<256x1xf32> to vector<256x128xf32>
    %6 = arith.addf %3, %5 : vector<256x128xf32>
    %cst_5 = arith.constant 0.000000e+00 : f32
    %7 = vector.broadcast %cst_5 : f32 to vector<256x128xf32>
    %8 = arith.maximumf %6, %7 : vector<256x128xf32>
    %c0_6 = arith.constant 0 : index
    %c0_7 = arith.constant 0 : index
    %9 = vector.load %arg4[%c0_6, %c0_7] : memref<256x256xbf16, #tpu.memory_space<vmem>>, vector<256x256xbf16>
    %10 = arith.truncf %8 : vector<256x128xf32> to vector<256x128xbf16>
    %cst_8 = arith.constant dense<0.000000e+00> : vector<256x128xf32>
    %11 = tpu.matmul %9, %10, %cst_8 {dimension_numbers = #tpu.dot_dimension_numbers<[1], [0], [0], [1], [0, 0, 1, 1], [], []>} : vector<256x256xbf16>, vector<256x128xbf16>, vector<256x128xf32> -> vector<256x128xf32>
    %c0_9 = arith.constant 0 : index
    %c0_10 = arith.constant 0 : index
    %12 = vector.load %arg5[%c0_9, %c0_10] : memref<256x1xf32, #tpu.memory_space<vmem>>, vector<256x1xf32>
    %13 = vector.broadcast %12 : vector<256x1xf32> to vector<256x128xf32>
    %14 = arith.addf %11, %13 : vector<256x128xf32>
    %cst_11 = arith.constant 0.000000e+00 : f32
    %15 = vector.broadcast %cst_11 : f32 to vector<256x128xf32>
    %16 = arith.maximumf %14, %15 : vector<256x128xf32>
    %c0_12 = arith.constant 0 : index
    %c0_13 = arith.constant 0 : index
    %17 = vector.load %arg6[%c0_12, %c0_13] : memref<256x1xf32, #tpu.memory_space<vmem>>, vector<256x1xf32>
    %18 = vector.broadcast %17 : vector<256x1xf32> to vector<256x128xf32>
    %19 = arith.mulf %16, %18 : vector<256x128xf32>
    %cst_14 = arith.constant dense<0.000000e+00> : vector<128xf32>
    %20 = vector.multi_reduction <add>, %19, %cst_14 [0] : vector<256x128xf32> to vector<128xf32>
    %21 = vector.shape_cast %20 : vector<128xf32> to vector<1x128xf32>
    %c0_15 = arith.constant 0 : index
    %c0_16 = arith.constant 0 : index
    %22 = memref.load %arg7[%c0_15, %c0_16] : memref<1x1xf32, #tpu.memory_space<smem>>
    %23 = vector.broadcast %22 : f32 to vector<1x128xf32>
    %24 = arith.addf %21, %23 : vector<1x128xf32>
    %c0_17 = arith.constant 0 : index
    %c0_18 = arith.constant 0 : index
    %25 = vector.load %arg8[%c0_17, %c0_18] : memref<1x128xf32, #tpu.memory_space<vmem>>, vector<1x128xf32>
    tpu.vector_store %arg8[%c0_17, %c0_18], %24 {strides = array<i32>} : memref<1x128xf32, #tpu.memory_space<vmem>>, vector<1x128xf32>,
    return
  }
  func.func @transform_0(%arg0: i32) -> (i32, i32) {
    %c0_i32 = arith.constant 0 : i32
    %c0_i32_0 = arith.constant 0 : i32
    return %c0_i32, %arg0 : i32, i32
  }
  func.func @transform_1(%arg0: i32) -> (i32, i32) {
    %c0_i32 = arith.constant 0 : i32
    %c0_i32_0 = arith.constant 0 : i32
    %c0_i32_1 = arith.constant 0 : i32
    return %c0_i32, %c0_i32_0 : i32, i32
  }
  func.func @transform_2(%arg0: i32) -> (i32, i32) {
    %c0_i32 = arith.constant 0 : i32
    %c0_i32_0 = arith.constant 0 : i32
    %c0_i32_1 = arith.constant 0 : i32
    return %c0_i32, %c0_i32_0 : i32, i32
  }
  func.func @transform_3(%arg0: i32) -> (i32, i32) {
    %c0_i32 = arith.constant 0 : i32
    %c0_i32_0 = arith.constant 0 : i32
    %c0_i32_1 = arith.constant 0 : i32
    return %c0_i32, %c0_i32_0 : i32, i32
  }
  func.func @transform_4(%arg0: i32) -> (i32, i32) {
    %c0_i32 = arith.constant 0 : i32
    %c0_i32_0 = arith.constant 0 : i32
    %c0_i32_1 = arith.constant 0 : i32
    return %c0_i32, %c0_i32_0 : i32, i32
  }
  func.func @transform_5(%arg0: i32) -> (i32, i32) {
    %c0_i32 = arith.constant 0 : i32
    %c0_i32_0 = arith.constant 0 : i32
    %c0_i32_1 = arith.constant 0 : i32
    return %c0_i32, %c0_i32_0 : i32, i32
  }
  func.func @transform_6(%arg0: i32) -> (i32, i32) {
    %c0_i32 = arith.constant 0 : i32
    %c0_i32_0 = arith.constant 0 : i32
    %c0_i32_1 = arith.constant 0 : i32
    return %c0_i32, %c0_i32_0 : i32, i32
  }
  func.func @transform_7(%arg0: i32) -> (i32, i32) {
    %c0_i32 = arith.constant 0 : i32
    %c0_i32_0 = arith.constant 0 : i32
    return %c0_i32, %arg0 : i32, i32
  }
}

</mosaic_0001>

<llo_original>
// kernel: tpu_custom_call.1
$region0: #{tpu_custom_call.1}
  #allocation0 [shape = 'u32[]', space=smem, size = 0x4, offset = 0x4, fixed_abs, tag = 'smem constant byte address 0x4 - core index']
  #allocation1 [shape = 'u32[144,128]{1,0:T(1,128)}', space=vmem, size = 0x12000, scoped, tag = 'internal scratch']
  #allocation2 [shape = 'f32[1,1]{1,0:T(1,128)S(6)}', space=smem, size = 0x200, scoped, tag = 'scoped memory for tpu_custom_call.1']
  %s0 = inlined_call_operand.vmem [shape: f32[8,128], index: 0, kind: input, shape index: {}]
  %s1 = inlined_call_operand.vmem [shape: bf16[256,8], index: 1, kind: input, shape index: {}]
  %s2 = inlined_call_operand.vmem [shape: f32[256,1], index: 2, kind: input, shape index: {}]
  %s3 = inlined_call_operand.vmem [shape: bf16[256,256], index: 3, kind: input, shape index: {}]
  %s4 = inlined_call_operand.vmem [shape: f32[256,1], index: 4, kind: input, shape index: {}]
  %s5 = inlined_call_operand.vmem [shape: f32[256,1], index: 5, kind: input, shape index: {}]
  %s6 = inlined_call_operand.<no memory space> [shape: f32[1,1], index: 6, kind: input, shape index: {}]
  %s7 = inlined_call_operand.hbm [shape: f32[1,128], index: 7, kind: output, shape index: {}]
  %s8 = sld [smem:[#allocation0]]
  $region38: #{tpu_custom_call.1} parent=0
    _
  %s10 = ssub.s32 1, %s8
  %s11 = scalar_select 0, %s10, %s8
  %12 = sst [smem:[#allocation2]] %s6
  $region1: #{tpu_custom_call.1} parent=0
    #allocation3 [shape = 'u8[512]{0}', space=vmem, size = 0x400, scoped, tag = 'output window, operand 0, single buffered']
    #allocation4 [shape = 's32[1]{0}', space=sflag, size = 0x4, scoped, tag = 'scoped memory for tpu_custom_call.1']
    %13 = vsyncpa [#allocation4], 0
    // Predicated region
    $region2: #{tpu_custom_call.1} parent=1 // pred_check
      _
    $region3: #{tpu_custom_call.1} parent=1 // pred_check_branch
      %15 = sbr.rel (0) target = $region5
    $region4: #{tpu_custom_call.1} parent=1 // pred_region
      _
    $region5: #{tpu_custom_call.1} parent=1 // pred_fallthru
      _
    // Predicated region
    $region6: #{tpu_custom_call.1} parent=1 // pred_check
      _
    $region7: #{tpu_custom_call.1} parent=1 // pred_check_branch
      %17 = sbr.rel (0) target = $region9
    $region8: #{tpu_custom_call.1} parent=1 // pred_region
      _
    $region9: #{tpu_custom_call.1} parent=1 // pred_fallthru
      _
    // Predicated region
    $region10: #{tpu_custom_call.1} parent=1 // pred_check
      _
    $region11: #{tpu_custom_call.1} parent=1 // pred_check_branch
      %19 = sbr.rel (0) target = $region13
    $region12: #{tpu_custom_call.1} parent=1 // pred_region
      _
    $region13: #{tpu_custom_call.1} parent=1 // pred_fallthru
      _
    // Predicated region
    $region14: #{tpu_custom_call.1} parent=1 // pred_check
      _
    $region15: #{tpu_custom_call.1} parent=1 // pred_check_branch
      %21 = sbr.rel (0) target = $region17
    $region16: #{tpu_custom_call.1} parent=1 // pred_region
      _
    $region17: #{tpu_custom_call.1} parent=1 // pred_fallthru
      _
    // Predicated region
    $region18: #{tpu_custom_call.1} parent=1 // pred_check
      _
    $region19: #{tpu_custom_call.1} parent=1 // pred_check_branch
      %23 = sbr.rel (0) target = $region21
    $region20: #{tpu_custom_call.1} parent=1 // pred_region
      _
    $region21: #{tpu_custom_call.1} parent=1 // pred_fallthru
      _
    // Predicated region
    $region22: #{tpu_custom_call.1} parent=1 // pred_check
      _
    $region23: #{tpu_custom_call.1} parent=1 // pred_check_branch
      %25 = sbr.rel (0) target = $region25
    $region24: #{tpu_custom_call.1} parent=1 // pred_region
      _
    $region25: #{tpu_custom_call.1} parent=1 // pred_fallthru
      _
    // Predicated region
    $region26: #{tpu_custom_call.1} parent=1 // pred_check
      _
    $region27: #{tpu_custom_call.1} parent=1 // pred_check_branch
      %27 = sbr.rel (0) target = $region29
    $region28: #{tpu_custom_call.1} parent=1 // pred_region
      _
    $region29: #{tpu_custom_call.1} parent=1 // pred_fallthru
      _
    %v29 = vld [vmem:[%s0] sm:$0xff]
    %v30 = vpack.c.bf16 %v29, %v29
    %v31 = vld [vmem:[%s1] sm:$0xf]
    %v32 = vld [vmem:[%s1 + $0x4] sm:$0xf]
    %v33 = vld [vmem:[%s1 + $0x8] sm:$0xf]
    %v34 = vld [vmem:[%s1 + $0xc] sm:$0xf]
    %v35 = vld [vmem:[%s1 + $0x10] sm:$0xf]
    %v36 = vld [vmem:[%s1 + $0x14] sm:$0xf]
    %v37 = vld [vmem:[%s1 + $0x18] sm:$0xf]
    %v38 = vld [vmem:[%s1 + $0x1c] sm:$0xf]
    %v39 = vld [vmem:[%s1 + $0x20] sm:$0xf]
    %v40 = vld [vmem:[%s1 + $0x24] sm:$0xf]
    %v41 = vld [vmem:[%s1 + $0x28] sm:$0xf]
    %v42 = vld [vmem:[%s1 + $0x2c] sm:$0xf]
    %v43 = vld [vmem:[%s1 + $0x30] sm:$0xf]
    %v44 = vld [vmem:[%s1 + $0x34] sm:$0xf]
    %v45 = vld [vmem:[%s1 + $0x38] sm:$0xf]
    %v46 = vld [vmem:[%s1 + $0x3c] sm:$0xf]
    %v47 = vld [vmem:[%s1 + $0x40] sm:$0xf]
    %v48 = vld [vmem:[%s1 + $0x44] sm:$0xf]
    %v49 = vld [vmem:[%s1 + $0x48] sm:$0xf]
    %v50 = vld [vmem:[%s1 + $0x4c] sm:$0xf]
    %v51 = vld [vmem:[%s1 + $0x50] sm:$0xf]
    %v52 = vld [vmem:[%s1 + $0x54] sm:$0xf]
    %v53 = vld [vmem:[%s1 + $0x58] sm:$0xf]
    %v54 = vld [vmem:[%s1 + $0x5c] sm:$0xf]
    %v55 = vld [vmem:[%s1 + $0x60] sm:$0xf]
    %v56 = vld [vmem:[%s1 + $0x64] sm:$0xf]
    %v57 = vld [vmem:[%s1 + $0x68] sm:$0xf]
    %v58 = vld [vmem:[%s1 + $0x6c] sm:$0xf]
    %v59 = vld [vmem:[%s1 + $0x70] sm:$0xf]
    %v60 = vld [vmem:[%s1 + $0x74] sm:$0xf]
    %v61 = vld [vmem:[%s1 + $0x78] sm:$0xf]
    %v62 = vld [vmem:[%s1 + $0x7c] sm:$0xf]
    %v63 = vld [vmem:[%s2] sm:$0xff]
    %v64 = vld [vmem:[%s2 + $0x8] sm:$0xff]
    %v65 = vld [vmem:[%s2 + $0x10] sm:$0xff]
    %v66 = vld [vmem:[%s2 + $0x18] sm:$0xff]
    %v67 = vld [vmem:[%s2 + $0x20] sm:$0xff]
    %v68 = vld [vmem:[%s2 + $0x28] sm:$0xff]
    %v69 = vld [vmem:[%s2 + $0x30] sm:$0xff]
    %v70 = vld [vmem:[%s2 + $0x38] sm:$0xff]
    %v71 = vld [vmem:[%s2 + $0x40] sm:$0xff]
    %v72 = vld [vmem:[%s2 + $0x48] sm:$0xff]
    %v73 = vld [vmem:[%s2 + $0x50] sm:$0xff]
    %v74 = vld [vmem:[%s2 + $0x58] sm:$0xff]
    %v75 = vld [vmem:[%s2 + $0x60] sm:$0xff]
    %v76 = vld [vmem:[%s2 + $0x68] sm:$0xff]
    %v77 = vld [vmem:[%s2 + $0x70] sm:$0xff]
    %v78 = vld [vmem:[%s2 + $0x78] sm:$0xff]
    %v79 = vld [vmem:[%s2 + $0x80] sm:$0xff]
    %v80 = vld [vmem:[%s2 + $0x88] sm:$0xff]
    %v81 = vld [vmem:[%s2 + $0x90] sm:$0xff]
    %v82 = vld [vmem:[%s2 + $0x98] sm:$0xff]
    %v83 = vld [vmem:[%s2 + $0xa0] sm:$0xff]
    %v84 = vld [vmem:[%s2 + $0xa8] sm:$0xff]
    %v85 = vld [vmem:[%s2 + $0xb0] sm:$0xff]
    %v86 = vld [vmem:[%s2 + $0xb8] sm:$0xff]
    %v87 = vld [vmem:[%s2 + $0xc0] sm:$0xff]
    %v88 = vld [vmem:[%s2 + $0xc8] sm:$0xff]
    %v89 = vld [vmem:[%s2 + $0xd0] sm:$0xff]
    %v90 = vld [vmem:[%s2 + $0xd8] sm:$0xff]
    %v91 = vld [vmem:[%s2 + $0xe0] sm:$0xff]
    %v92 = vld [vmem:[%s2 + $0xe8] sm:$0xff]
    %v93 = vld [vmem:[%s2 + $0xf0] sm:$0xff]
    %v94 = vld [vmem:[%s2 + $0xf8] sm:$0xff]
    %96 = vset.pattern.permute.xlu0 0
    %97 = vperm.xlu0 %96, %v63
    %v98 = vpop.permute.xlu0 %97
    %101 = vset.pattern.permute.xlu0 0
    %102 = vperm.xlu0 %101, %v64
    %v103 = vpop.permute.xlu0 %102
    %106 = vset.pattern.permute.xlu0 0
    %107 = vperm.xlu0 %106, %v65
    %v108 = vpop.permute.xlu0 %107
    %111 = vset.pattern.permute.xlu0 0
    %112 = vperm.xlu0 %111, %v66
    %v113 = vpop.permute.xlu0 %112
    %116 = vset.pattern.permute.xlu0 0
    %117 = vperm.xlu0 %116, %v67
    %v118 = vpop.permute.xlu0 %117
    %121 = vset.pattern.permute.xlu0 0
    %122 = vperm.xlu0 %121, %v68
    %v123 = vpop.permute.xlu0 %122
    %126 = vset.pattern.permute.xlu0 0
    %127 = vperm.xlu0 %126, %v69
    %v128 = vpop.permute.xlu0 %127
    %131 = vset.pattern.permute.xlu0 0
    %132 = vperm.xlu0 %131, %v70
    %v133 = vpop.permute.xlu0 %132
    %136 = vset.pattern.permute.xlu0 0
    %137 = vperm.xlu0 %136, %v71
    %v138 = vpop.permute.xlu0 %137
    %141 = vset.pattern.permute.xlu0 0
    %142 = vperm.xlu0 %141, %v72
    %v143 = vpop.permute.xlu0 %142
    %146 = vset.pattern.permute.xlu0 0
    %147 = vperm.xlu0 %146, %v73
    %v148 = vpop.permute.xlu0 %147
    %151 = vset.pattern.permute.xlu0 0
    %152 = vperm.xlu0 %151, %v74
    %v153 = vpop.permute.xlu0 %152
    %156 = vset.pattern.permute.xlu0 0
    %157 = vperm.xlu0 %156, %v75
    %v158 = vpop.permute.xlu0 %157
    %161 = vset.pattern.permute.xlu0 0
    %162 = vperm.xlu0 %161, %v76
    %v163 = vpop.permute.xlu0 %162
    %166 = vset.pattern.permute.xlu0 0
    %167 = vperm.xlu0 %166, %v77
    %v168 = vpop.permute.xlu0 %167
    %171 = vset.pattern.permute.xlu0 0
    %172 = vperm.xlu0 %171, %v78
    %v173 = vpop.permute.xlu0 %172
    %176 = vset.pattern.permute.xlu0 0
    %177 = vperm.xlu0 %176, %v79
    %v178 = vpop.permute.xlu0 %177
    %181 = vset.pattern.permute.xlu0 0
    %182 = vperm.xlu0 %181, %v80
    %v183 = vpop.permute.xlu0 %182
    %186 = vset.pattern.permute.xlu0 0
    %187 = vperm.xlu0 %186, %v81
    %v188 = vpop.permute.xlu0 %187
    %191 = vset.pattern.permute.xlu0 0
    %192 = vperm.xlu0 %191, %v82
    %v193 = vpop.permute.xlu0 %192
    %196 = vset.pattern.permute.xlu0 0
    %197 = vperm.xlu0 %196, %v83
    %v198 = vpop.permute.xlu0 %197
    %201 = vset.pattern.permute.xlu0 0
    %202 = vperm.xlu0 %201, %v84
    %v203 = vpop.permute.xlu0 %202
    %206 = vset.pattern.permute.xlu0 0
    %207 = vperm.xlu0 %206, %v85
    %v208 = vpop.permute.xlu0 %207
    %211 = vset.pattern.permute.xlu0 0
    %212 = vperm.xlu0 %211, %v86
    %v213 = vpop.permute.xlu0 %212
    %216 = vset.pattern.permute.xlu0 0
    %217 = vperm.xlu0 %216, %v87
    %v218 = vpop.permute.xlu0 %217
    %221 = vset.pattern.permute.xlu0 0
    %222 = vperm.xlu0 %221, %v88
    %v223 = vpop.permute.xlu0 %222
    %226 = vset.pattern.permute.xlu0 0
    %227 = vperm.xlu0 %226, %v89
    %v228 = vpop.permute.xlu0 %227
    %231 = vset.pattern.permute.xlu0 0
    %232 = vperm.xlu0 %231, %v90
    %v233 = vpop.permute.xlu0 %232
    %236 = vset.pattern.permute.xlu0 0
    %237 = vperm.xlu0 %236, %v91
    %v238 = vpop.permute.xlu0 %237
    %241 = vset.pattern.permute.xlu0 0
    %242 = vperm.xlu0 %241, %v92
    %v243 = vpop.permute.xlu0 %242
    %246 = vset.pattern.permute.xlu0 0
    %247 = vperm.xlu0 %246, %v93
    %v248 = vpop.permute.xlu0 %247
    %251 = vset.pattern.permute.xlu0 0
    %252 = vperm.xlu0 %251, %v94
    %v253 = vpop.permute.xlu0 %252
    %v287 = vunpack.c.l.b16 %v31
    %v288 = vunpack.c.l.b16 %v32
    %v289 = vunpack.c.l.b16 %v33
    %v290 = vunpack.c.l.b16 %v34
    %v291 = vunpack.c.l.b16 %v35
    %v292 = vunpack.c.l.b16 %v36
    %v293 = vunpack.c.l.b16 %v37
    %v294 = vunpack.c.l.b16 %v38
    %v295 = vunpack.c.l.b16 %v39
    %v296 = vunpack.c.l.b16 %v40
    %v297 = vunpack.c.l.b16 %v41
    %v298 = vunpack.c.l.b16 %v42
    %v299 = vunpack.c.l.b16 %v43
    %v300 = vunpack.c.l.b16 %v44
    %v301 = vunpack.c.l.b16 %v45
    %v302 = vunpack.c.l.b16 %v46
    %v303 = vunpack.c.l.b16 %v47
    %v304 = vunpack.c.l.b16 %v48
    %v305 = vunpack.c.l.b16 %v49
    %v306 = vunpack.c.l.b16 %v50
    %v307 = vunpack.c.l.b16 %v51
    %v308 = vunpack.c.l.b16 %v52
    %v309 = vunpack.c.l.b16 %v53
    %v310 = vunpack.c.l.b16 %v54
    %v311 = vunpack.c.l.b16 %v55
    %v312 = vunpack.c.l.b16 %v56
    %v313 = vunpack.c.l.b16 %v57
    %v314 = vunpack.c.l.b16 %v58
    %v315 = vunpack.c.l.b16 %v59
    %v316 = vunpack.c.l.b16 %v60
    %v317 = vunpack.c.l.b16 %v61
    %v318 = vunpack.c.l.b16 %v62
    %v319 = vpack.c.b16 %v288, %v287
    %v320 = vpack.c.b16 %v290, %v289
    %v321 = vpack.c.b16 %v292, %v291
    %v322 = vpack.c.b16 %v294, %v293
    %v323 = vpack.c.b16 %v296, %v295
    %v324 = vpack.c.b16 %v298, %v297
    %v325 = vpack.c.b16 %v300, %v299
    %v326 = vpack.c.b16 %v302, %v301
    %v327 = vpack.c.b16 %v304, %v303
    %v328 = vpack.c.b16 %v306, %v305
    %v329 = vpack.c.b16 %v308, %v307
    %v330 = vpack.c.b16 %v310, %v309
    %v331 = vpack.c.b16 %v312, %v311
    %v332 = vpack.c.b16 %v314, %v313
    %v333 = vpack.c.b16 %v316, %v315
    %v334 = vpack.c.b16 %v318, %v317
    %vm335 = vcmask 64512
    %v337 = vsel %vm335, %v319, 0
    %v340 = vsel %vm335, %v320, 0
    %v343 = vsel %vm335, %v321, 0
    %v346 = vsel %vm335, %v322, 0
    %v349 = vsel %vm335, %v323, 0
    %v352 = vsel %vm335, %v324, 0
    %v355 = vsel %vm335, %v325, 0
    %v358 = vsel %vm335, %v326, 0
    %v361 = vsel %vm335, %v327, 0
    %v364 = vsel %vm335, %v328, 0
    %v367 = vsel %vm335, %v329, 0
    %v370 = vsel %vm335, %v330, 0
    %v373 = vsel %vm335, %v331, 0
    %v376 = vsel %vm335, %v332, 0
    %v379 = vsel %vm335, %v333, 0
    %v382 = vsel %vm335, %v334, 0
    %vm384 = vcmask 1043456
    %v386 = vsel %vm384, %v30, 0
    %388 = vmatprep.subr.bf16.mxu0 0
    %389 = vmatpush1.bf16.msra.mxu0 %v386
    %390 = vmatprep.subr.bf16.mxu0 0
    %391 = vmatpush1.bf16.msra.mxu0 0
    %392 = vmatprep.subr.bf16.mxu0 0
    %393 = vmatpush1.bf16.msra.mxu0 0
    %394 = vmatprep.subr.bf16.mxu0 0
    %395 = vmatpush1.bf16.msra.mxu0 0
    %396 = vmatprep.subr.bf16.mxu0 0
    %397 = vmatpush1.bf16.msra.mxu0 0
    %398 = vmatprep.subr.bf16.mxu0 0
    %399 = vmatpush1.bf16.msra.mxu0 0
    %400 = vmatprep.subr.bf16.mxu0 0
    %401 = vmatpush1.bf16.msra.mxu0 0
    %402 = vmatprep.subr.bf16.mxu0 0
    %403 = vmatpush1.bf16.msra.mxu0 0
    %404 = vmatprep.subr.bf16.mxu0 0
    %405 = vmatpush1.bf16.msra.mxu0 0
    %406 = vmatprep.subr.bf16.mxu0 0
    %407 = vmatpush1.bf16.msra.mxu0 0
    %408 = vmatprep.subr.bf16.mxu0 0
    %409 = vmatpush1.bf16.msra.mxu0 0
    %410 = vmatprep.subr.bf16.mxu0 0
    %411 = vmatpush1.bf16.msra.mxu0 0
    %412 = vmatprep.subr.bf16.mxu0 0
    %413 = vmatpush1.bf16.msra.mxu0 0
    %414 = vmatprep.subr.bf16.mxu0 0
    %415 = vmatpush1.bf16.msra.mxu0 0
    %416 = vmatprep.subr.bf16.mxu0 0
    %417 = vmatpush1.bf16.msra.mxu0 0
    %418 = vmatprep.subr.bf16.mxu0 0
    %419 = vmatpush1.bf16.msra.mxu0 0
    %420 = vmatprep.mubr.bf16.mxu0 0
    %421 = vmatmul.mubr.bf16.gmra.mrb[0].mxu0 %v337
    %v422 = vpop.f32.mrb[0].mxu0
    %v423 = vadd.f32 %v98, %v422
    %v424 = vpop.f32.mrb[0].mxu0
    %v425 = vpop.f32.mrb[0].mxu0
    %v426 = vadd.f32 %v103, %v425
    %v427 = vpop.f32.mrb[0].mxu0
    %428 = vmatprep.mubr.bf16.mxu0 0
    %429 = vmatmul.mubr.bf16.gmra.mrb[0].mxu0 %v340
    %v430 = vpop.f32.mrb[0].mxu0
    %v431 = vadd.f32 %v108, %v430
    %v432 = vpop.f32.mrb[0].mxu0
    %v433 = vpop.f32.mrb[0].mxu0
    %v434 = vadd.f32 %v113, %v433
    %v435 = vpop.f32.mrb[0].mxu0
    %436 = vmatprep.mubr.bf16.mxu0 0
    %437 = vmatmul.mubr.bf16.gmra.mrb[0].mxu0 %v343
    %v438 = vpop.f32.mrb[0].mxu0
    %v439 = vadd.f32 %v118, %v438
    %v440 = vpop.f32.mrb[0].mxu0
    %v441 = vpop.f32.mrb[0].mxu0
    %v442 = vadd.f32 %v123, %v441
    %v443 = vpop.f32.mrb[0].mxu0
    %444 = vmatprep.mubr.bf16.mxu0 0
    %445 = vmatmul.mubr.bf16.gmra.mrb[0].mxu0 %v346
    %v446 = vpop.f32.mrb[0].mxu0
    %v447 = vadd.f32 %v128, %v446
    %v448 = vpop.f32.mrb[0].mxu0
    %v449 = vpop.f32.mrb[0].mxu0
    %v450 = vadd.f32 %v133, %v449
    %v451 = vpop.f32.mrb[0].mxu0
    %452 = vmatprep.mubr.bf16.mxu0 0
    %453 = vmatmul.mubr.bf16.gmra.mrb[0].mxu0 %v349
    %v454 = vpop.f32.mrb[0].mxu0
    %v455 = vadd.f32 %v138, %v454
    %v456 = vpop.f32.mrb[0].mxu0
    %v457 = vpop.f32.mrb[0].mxu0
    %v458 = vadd.f32 %v143, %v457
    %v459 = vpop.f32.mrb[0].mxu0
    %460 = vmatprep.mubr.bf16.mxu0 0
    %461 = vmatmul.mubr.bf16.gmra.mrb[0].mxu0 %v352
    %v462 = vpop.f32.mrb[0].mxu0
    %v463 = vadd.f32 %v148, %v462
    %v464 = vpop.f32.mrb[0].mxu0
    %v465 = vpop.f32.mrb[0].mxu0
    %v466 = vadd.f32 %v153, %v465
    %v467 = vpop.f32.mrb[0].mxu0
    %468 = vmatprep.mubr.bf16.mxu0 0
    %469 = vmatmul.mubr.bf16.gmra.mrb[0].mxu0 %v355
    %v470 = vpop.f32.mrb[0].mxu0
    %v471 = vadd.f32 %v158, %v470
    %v472 = vpop.f32.mrb[0].mxu0
    %v473 = vpop.f32.mrb[0].mxu0
    %v474 = vadd.f32 %v163, %v473
    %v475 = vpop.f32.mrb[0].mxu0
    %476 = vmatprep.mubr.bf16.mxu0 0
    %477 = vmatmul.mubr.bf16.gmra.mrb[0].mxu0 %v358
    %v478 = vpop.f32.mrb[0].mxu0
    %v479 = vadd.f32 %v168, %v478
    %v480 = vpop.f32.mrb[0].mxu0
    %v481 = vpop.f32.mrb[0].mxu0
    %v482 = vadd.f32 %v173, %v481
    %v483 = vpop.f32.mrb[0].mxu0
    %484 = vmatprep.mubr.bf16.mxu0 0
    %485 = vmatmul.mubr.bf16.gmra.mrb[0].mxu0 %v361
    %v486 = vpop.f32.mrb[0].mxu0
    %v487 = vadd.f32 %v178, %v486
    %v488 = vpop.f32.mrb[0].mxu0
    %v489 = vpop.f32.mrb[0].mxu0
    %v490 = vadd.f32 %v183, %v489
    %v491 = vpop.f32.mrb[0].mxu0
    %492 = vmatprep.mubr.bf16.mxu0 0
    %493 = vmatmul.mubr.bf16.gmra.mrb[0].mxu0 %v364
    %v494 = vpop.f32.mrb[0].mxu0
    %v495 = vadd.f32 %v188, %v494
    %v496 = vpop.f32.mrb[0].mxu0
    %v497 = vpop.f32.mrb[0].mxu0
    %v498 = vadd.f32 %v193, %v497
    %v499 = vpop.f32.mrb[0].mxu0
    %500 = vmatprep.mubr.bf16.mxu0 0
    %501 = vmatmul.mubr.bf16.gmra.mrb[0].mxu0 %v367
    %v502 = vpop.f32.mrb[0].mxu0
    %v503 = vadd.f32 %v198, %v502
    %v504 = vpop.f32.mrb[0].mxu0
    %v505 = vpop.f32.mrb[0].mxu0
    %v506 = vadd.f32 %v203, %v505
    %v507 = vpop.f32.mrb[0].mxu0
    %508 = vmatprep.mubr.bf16.mxu0 0
    %509 = vmatmul.mubr.bf16.gmra.mrb[0].mxu0 %v370
    %v510 = vpop.f32.mrb[0].mxu0
    %v511 = vadd.f32 %v208, %v510
    %v512 = vpop.f32.mrb[0].mxu0
    %v513 = vpop.f32.mrb[0].mxu0
    %v514 = vadd.f32 %v213, %v513
    %v515 = vpop.f32.mrb[0].mxu0
    %516 = vmatprep.mubr.bf16.mxu0 0
    %517 = vmatmul.mubr.bf16.gmra.mrb[0].mxu0 %v373
    %v518 = vpop.f32.mrb[0].mxu0
    %v519 = vadd.f32 %v218, %v518
    %v520 = vpop.f32.mrb[0].mxu0
    %v521 = vpop.f32.mrb[0].mxu0
    %v522 = vadd.f32 %v223, %v521
    %v523 = vpop.f32.mrb[0].mxu0
    %524 = vmatprep.mubr.bf16.mxu0 0
    %525 = vmatmul.mubr.bf16.gmra.mrb[0].mxu0 %v376
    %v526 = vpop.f32.mrb[0].mxu0
    %v527 = vadd.f32 %v228, %v526
    %v528 = vpop.f32.mrb[0].mxu0
    %v529 = vpop.f32.mrb[0].mxu0
    %v530 = vadd.f32 %v233, %v529
    %v531 = vpop.f32.mrb[0].mxu0
    %532 = vmatprep.mubr.bf16.mxu0 0
    %533 = vmatmul.mubr.bf16.gmra.mrb[0].mxu0 %v379
    %v534 = vpop.f32.mrb[0].mxu0
    %v535 = vadd.f32 %v238, %v534
    %v536 = vpop.f32.mrb[0].mxu0
    %v537 = vpop.f32.mrb[0].mxu0
    %v538 = vadd.f32 %v243, %v537
    %v539 = vpop.f32.mrb[0].mxu0
    %540 = vmatprep.mubr.bf16.mxu0 0
    %541 = vmatmul.mubr.bf16.gmra.mrb[0].mxu0 %v382
    %v542 = vpop.f32.mrb[0].mxu0
    %v543 = vadd.f32 %v248, %v542
    %v544 = vpop.f32.mrb[0].mxu0
    %v545 = vpop.f32.mrb[0].mxu0
    %v546 = vadd.f32 %v253, %v545
    %v547 = vpop.f32.mrb[0].mxu0
    %548 = vdwg.mxu0
    %v549 = vmax.f32 %v423, 0.0
    %v550 = vmax.f32 %v426, 0.0
    %v551 = vmax.f32 %v431, 0.0
    %v552 = vmax.f32 %v434, 0.0
    %v553 = vmax.f32 %v439, 0.0
    %v554 = vmax.f32 %v442, 0.0
    %v555 = vmax.f32 %v447, 0.0
    %v556 = vmax.f32 %v450, 0.0
    %v557 = vmax.f32 %v455, 0.0
    %v558 = vmax.f32 %v458, 0.0
    %v559 = vmax.f32 %v463, 0.0
    %v560 = vmax.f32 %v466, 0.0
    %v561 = vmax.f32 %v471, 0.0
    %v562 = vmax.f32 %v474, 0.0
    %v563 = vmax.f32 %v479, 0.0
    %v564 = vmax.f32 %v482, 0.0
    %v565 = vmax.f32 %v487, 0.0
    %v566 = vmax.f32 %v490, 0.0
    %v567 = vmax.f32 %v495, 0.0
    %v568 = vmax.f32 %v498, 0.0
    %v569 = vmax.f32 %v503, 0.0
    %v570 = vmax.f32 %v506, 0.0
    %v571 = vmax.f32 %v511, 0.0
    %v572 = vmax.f32 %v514, 0.0
    %v573 = vmax.f32 %v519, 0.0
    %v574 = vmax.f32 %v522, 0.0
    %v575 = vmax.f32 %v527, 0.0
    %v576 = vmax.f32 %v530, 0.0
    %v577 = vmax.f32 %v535, 0.0
    %v578 = vmax.f32 %v538, 0.0
    %v579 = vmax.f32 %v543, 0.0
    %v580 = vmax.f32 %v546, 0.0
    %v581 = vld [vmem:[%s3] sm:$0xff]
    %v582 = vld [vmem:[%s3 + $0x8] sm:$0xff]
    %v583 = vld [vmem:[%s3 + $0x10] sm:$0xff]
    %v584 = vld [vmem:[%s3 + $0x18] sm:$0xff]
    %v585 = vld [vmem:[%s3 + $0x20] sm:$0xff]
    %v586 = vld [vmem:[%s3 + $0x28] sm:$0xff]
    %v587 = vld [vmem:[%s3 + $0x30] sm:$0xff]
    %v588 = vld [vmem:[%s3 + $0x38] sm:$0xff]
    %v589 = vld [vmem:[%s3 + $0x40] sm:$0xff]
    %v590 = vld [vmem:[%s3 + $0x48] sm:$0xff]
    %v591 = vld [vmem:[%s3 + $0x50] sm:$0xff]
    %v592 = vld [vmem:[%s3 + $0x58] sm:$0xff]
    %v593 = vld [vmem:[%s3 + $0x60] sm:$0xff]
    %v594 = vld [vmem:[%s3 + $0x68] sm:$0xff]
    %v595 = vld [vmem:[%s3 + $0x70] sm:$0xff]
    %v596 = vld [vmem:[%s3 + $0x78] sm:$0xff]
    %v597 = vld [vmem:[%s3 + $0x80] sm:$0xff]
    %v598 = vld [vmem:[%s3 + $0x88] sm:$0xff]
    %v599 = vld [vmem:[%s3 + $0x90] sm:$0xff]
    %v600 = vld [vmem:[%s3 + $0x98] sm:$0xff]
    %v601 = vld [vmem:[%s3 + $0xa0] sm:$0xff]
    %v602 = vld [vmem:[%s3 + $0xa8] sm:$0xff]
    %v603 = vld [vmem:[%s3 + $0xb0] sm:$0xff]
    %v604 = vld [vmem:[%s3 + $0xb8] sm:$0xff]
    %v605 = vld [vmem:[%s3 + $0xc0] sm:$0xff]
    %v606 = vld [vmem:[%s3 + $0xc8] sm:$0xff]
    %v607 = vld [vmem:[%s3 + $0xd0] sm:$0xff]
    %v608 = vld [vmem:[%s3 + $0xd8] sm:$0xff]
    %v609 = vld [vmem:[%s3 + $0xe0] sm:$0xff]
    %v610 = vld [vmem:[%s3 + $0xe8] sm:$0xff]
    %v611 = vld [vmem:[%s3 + $0xf0] sm:$0xff]
    %v612 = vld [vmem:[%s3 + $0xf8] sm:$0xff]
    %v613 = vpack.c.bf16 %v550, %v549
    %v614 = vpack.c.bf16 %v552, %v551
    %v615 = vpack.c.bf16 %v554, %v553
    %v616 = vpack.c.bf16 %v556, %v555
    %v617 = vpack.c.bf16 %v558, %v557
    %v618 = vpack.c.bf16 %v560, %v559
    %v619 = vpack.c.bf16 %v562, %v561
    %v620 = vpack.c.bf16 %v564, %v563
    %v621 = vpack.c.bf16 %v566, %v565
    %v622 = vpack.c.bf16 %v568, %v567
    %v623 = vpack.c.bf16 %v570, %v569
    %v624 = vpack.c.bf16 %v572, %v571
    %v625 = vpack.c.bf16 %v574, %v573
    %v626 = vpack.c.bf16 %v576, %v575
    %v627 = vpack.c.bf16 %v578, %v577
    %v628 = vpack.c.bf16 %v580, %v579
    %v629 = vld [vmem:[%s4] sm:$0xff]
    %v630 = vld [vmem:[%s4 + $0x8] sm:$0xff]
    %v631 = vld [vmem:[%s4 + $0x10] sm:$0xff]
    %v632 = vld [vmem:[%s4 + $0x18] sm:$0xff]
    %v633 = vld [vmem:[%s4 + $0x20] sm:$0xff]
    %v634 = vld [vmem:[%s4 + $0x28] sm:$0xff]
    %v635 = vld [vmem:[%s4 + $0x30] sm:$0xff]
    %v636 = vld [vmem:[%s4 + $0x38] sm:$0xff]
    %v637 = vld [vmem:[%s4 + $0x40] sm:$0xff]
    %v638 = vld [vmem:[%s4 + $0x48] sm:$0xff]
    %v639 = vld [vmem:[%s4 + $0x50] sm:$0xff]
    %v640 = vld [vmem:[%s4 + $0x58] sm:$0xff]
    %v641 = vld [vmem:[%s4 + $0x60] sm:$0xff]
    %v642 = vld [vmem:[%s4 + $0x68] sm:$0xff]
    %v643 = vld [vmem:[%s4 + $0x70] sm:$0xff]
    %v644 = vld [vmem:[%s4 + $0x78] sm:$0xff]
    %v645 = vld [vmem:[%s4 + $0x80] sm:$0xff]
    %v646 = vld [vmem:[%s4 + $0x88] sm:$0xff]
    %v647 = vld [vmem:[%s4 + $0x90] sm:$0xff]
    %v648 = vld [vmem:[%s4 + $0x98] sm:$0xff]
    %v649 = vld [vmem:[%s4 + $0xa0] sm:$0xff]
    %v650 = vld [vmem:[%s4 + $0xa8] sm:$0xff]
    %v651 = vld [vmem:[%s4 + $0xb0] sm:$0xff]
    %v652 = vld [vmem:[%s4 + $0xb8] sm:$0xff]
    %v653 = vld [vmem:[%s4 + $0xc0] sm:$0xff]
    %v654 = vld [vmem:[%s4 + $0xc8] sm:$0xff]
    %v655 = vld [vmem:[%s4 + $0xd0] sm:$0xff]
    %v656 = vld [vmem:[%s4 + $0xd8] sm:$0xff]
    %v657 = vld [vmem:[%s4 + $0xe0] sm:$0xff]
    %v658 = vld [vmem:[%s4 + $0xe8] sm:$0xff]
    %v659 = vld [vmem:[%s4 + $0xf0] sm:$0xff]
    %v660 = vld [vmem:[%s4 + $0xf8] sm:$0xff]
    %662 = vset.pattern.permute.xlu0 0
    %663 = vperm.xlu0 %662, %v629
    %v664 = vpop.permute.xlu0 %663
    %667 = vset.pattern.permute.xlu0 0
    %668 = vperm.xlu0 %667, %v630
    %v669 = vpop.permute.xlu0 %668
    %672 = vset.pattern.permute.xlu0 0
    %673 = vperm.xlu0 %672, %v631
    %v674 = vpop.permute.xlu0 %673
    %677 = vset.pattern.permute.xlu0 0
    %678 = vperm.xlu0 %677, %v632
    %v679 = vpop.permute.xlu0 %678
    %682 = vset.pattern.permute.xlu0 0
    %683 = vperm.xlu0 %682, %v633
    %v684 = vpop.permute.xlu0 %683
    %687 = vset.pattern.permute.xlu0 0
    %688 = vperm.xlu0 %687, %v634
    %v689 = vpop.permute.xlu0 %688
    %692 = vset.pattern.permute.xlu0 0
    %693 = vperm.xlu0 %692, %v635
    %v694 = vpop.permute.xlu0 %693
    %697 = vset.pattern.permute.xlu0 0
    %698 = vperm.xlu0 %697, %v636
    %v699 = vpop.permute.xlu0 %698
    %702 = vset.pattern.permute.xlu0 0
    %703 = vperm.xlu0 %702, %v637
    %v704 = vpop.permute.xlu0 %703
    %707 = vset.pattern.permute.xlu0 0
    %708 = vperm.xlu0 %707, %v638
    %v709 = vpop.permute.xlu0 %708
    %712 = vset.pattern.permute.xlu0 0
    %713 = vperm.xlu0 %712, %v639
    %v714 = vpop.permute.xlu0 %713
    %717 = vset.pattern.permute.xlu0 0
    %718 = vperm.xlu0 %717, %v640
    %v719 = vpop.permute.xlu0 %718
    %722 = vset.pattern.permute.xlu0 0
    %723 = vperm.xlu0 %722, %v641
    %v724 = vpop.permute.xlu0 %723
    %727 = vset.pattern.permute.xlu0 0
    %728 = vperm.xlu0 %727, %v642
    %v729 = vpop.permute.xlu0 %728
    %732 = vset.pattern.permute.xlu0 0
    %733 = vperm.xlu0 %732, %v643
    %v734 = vpop.permute.xlu0 %733
    %737 = vset.pattern.permute.xlu0 0
    %738 = vperm.xlu0 %737, %v644
    %v739 = vpop.permute.xlu0 %738
    %742 = vset.pattern.permute.xlu0 0
    %743 = vperm.xlu0 %742, %v645
    %v744 = vpop.permute.xlu0 %743
    %747 = vset.pattern.permute.xlu0 0
    %748 = vperm.xlu0 %747, %v646
    %v749 = vpop.permute.xlu0 %748
    %752 = vset.pattern.permute.xlu0 0
    %753 = vperm.xlu0 %752, %v647
    %v754 = vpop.permute.xlu0 %753
    %757 = vset.pattern.permute.xlu0 0
    %758 = vperm.xlu0 %757, %v648
    %v759 = vpop.permute.xlu0 %758
    %762 = vset.pattern.permute.xlu0 0
    %763 = vperm.xlu0 %762, %v649
    %v764 = vpop.permute.xlu0 %763
    %767 = vset.pattern.permute.xlu0 0
    %768 = vperm.xlu0 %767, %v650
    %v769 = vpop.permute.xlu0 %768
    %772 = vset.pattern.permute.xlu0 0
    %773 = vperm.xlu0 %772, %v651
    %v774 = vpop.permute.xlu0 %773
    %777 = vset.pattern.permute.xlu0 0
    %778 = vperm.xlu0 %777, %v652
    %v779 = vpop.permute.xlu0 %778
    %782 = vset.pattern.permute.xlu0 0
    %783 = vperm.xlu0 %782, %v653
    %v784 = vpop.permute.xlu0 %783
    %787 = vset.pattern.permute.xlu0 0
    %788 = vperm.xlu0 %787, %v654
    %v789 = vpop.permute.xlu0 %788
    %792 = vset.pattern.permute.xlu0 0
    %793 = vperm.xlu0 %792, %v655
    %v794 = vpop.permute.xlu0 %793
    %797 = vset.pattern.permute.xlu0 0
    %798 = vperm.xlu0 %797, %v656
    %v799 = vpop.permute.xlu0 %798
    %802 = vset.pattern.permute.xlu0 0
    %803 = vperm.xlu0 %802, %v657
    %v804 = vpop.permute.xlu0 %803
    %807 = vset.pattern.permute.xlu0 0
    %808 = vperm.xlu0 %807, %v658
    %v809 = vpop.permute.xlu0 %808
    %812 = vset.pattern.permute.xlu0 0
    %813 = vperm.xlu0 %812, %v659
    %v814 = vpop.permute.xlu0 %813
    %817 = vset.pattern.permute.xlu0 0
    %818 = vperm.xlu0 %817, %v660
    %v819 = vpop.permute.xlu0 %818
    %v853 = vunpack.c.l.b16 %v581
    %v854 = vunpack.c.h.b16 %v581
    %v855 = vunpack.c.l.b16 %v582
    %v856 = vunpack.c.h.b16 %v582
    %v857 = vunpack.c.l.b16 %v583
    %v858 = vunpack.c.h.b16 %v583
    %v859 = vunpack.c.l.b16 %v584
    %v860 = vunpack.c.h.b16 %v584
    %v861 = vunpack.c.l.b16 %v585
    %v862 = vunpack.c.h.b16 %v585
    %v863 = vunpack.c.l.b16 %v586
    %v864 = vunpack.c.h.b16 %v586
    %v865 = vunpack.c.l.b16 %v587
    %v866 = vunpack.c.h.b16 %v587
    %v867 = vunpack.c.l.b16 %v588
    %v868 = vunpack.c.h.b16 %v588
    %v869 = vunpack.c.l.b16 %v589
    %v870 = vunpack.c.h.b16 %v589
    %v871 = vunpack.c.l.b16 %v590
    %v872 = vunpack.c.h.b16 %v590
    %v873 = vunpack.c.l.b16 %v591
    %v874 = vunpack.c.h.b16 %v591
    %v875 = vunpack.c.l.b16 %v592
    %v876 = vunpack.c.h.b16 %v592
    %v877 = vunpack.c.l.b16 %v593
    %v878 = vunpack.c.h.b16 %v593
    %v879 = vunpack.c.l.b16 %v594
    %v880 = vunpack.c.h.b16 %v594
    %v881 = vunpack.c.l.b16 %v595
    %v882 = vunpack.c.h.b16 %v595
    %v883 = vunpack.c.l.b16 %v596
    %v884 = vunpack.c.h.b16 %v596
    %v885 = vunpack.c.l.b16 %v597
    %v886 = vunpack.c.h.b16 %v597
    %v887 = vunpack.c.l.b16 %v598
    %v888 = vunpack.c.h.b16 %v598
    %v889 = vunpack.c.l.b16 %v599
    %v890 = vunpack.c.h.b16 %v599
    %v891 = vunpack.c.l.b16 %v600
    %v892 = vunpack.c.h.b16 %v600
    %v893 = vunpack.c.l.b16 %v601
    %v894 = vunpack.c.h.b16 %v601
    %v895 = vunpack.c.l.b16 %v602
    %v896 = vunpack.c.h.b16 %v602
    %v897 = vunpack.c.l.b16 %v603
    %v898 = vunpack.c.h.b16 %v603
    %v899 = vunpack.c.l.b16 %v604
    %v900 = vunpack.c.h.b16 %v604
    %v901 = vunpack.c.l.b16 %v605
    %v902 = vunpack.c.h.b16 %v605
    %v903 = vunpack.c.l.b16 %v606
    %v904 = vunpack.c.h.b16 %v606
    %v905 = vunpack.c.l.b16 %v607
    %v906 = vunpack.c.h.b16 %v607
    %v907 = vunpack.c.l.b16 %v608
    %v908 = vunpack.c.h.b16 %v608
    %v909 = vunpack.c.l.b16 %v609
    %v910 = vunpack.c.h.b16 %v609
    %v911 = vunpack.c.l.b16 %v610
    %v912 = vunpack.c.h.b16 %v610
    %v913 = vunpack.c.l.b16 %v611
    %v914 = vunpack.c.h.b16 %v611
    %v915 = vunpack.c.l.b16 %v612
    %v916 = vunpack.c.h.b16 %v612
    %v917 = vpack.c.b16 %v855, %v853
    %v918 = vpack.c.b16 %v856, %v854
    %v919 = vpack.c.b16 %v859, %v857
    %v920 = vpack.c.b16 %v860, %v858
    %v921 = vpack.c.b16 %v863, %v861
    %v922 = vpack.c.b16 %v864, %v862
    %v923 = vpack.c.b16 %v867, %v865
    %v924 = vpack.c.b16 %v868, %v866
    %v925 = vpack.c.b16 %v871, %v869
    %v926 = vpack.c.b16 %v872, %v870
    %v927 = vpack.c.b16 %v875, %v873
    %v928 = vpack.c.b16 %v876, %v874
    %v929 = vpack.c.b16 %v879, %v877
    %v930 = vpack.c.b16 %v880, %v878
    %v931 = vpack.c.b16 %v883, %v881
    %v932 = vpack.c.b16 %v884, %v882
    %v933 = vpack.c.b16 %v887, %v885
    %v934 = vpack.c.b16 %v888, %v886
    %v935 = vpack.c.b16 %v891, %v889
    %v936 = vpack.c.b16 %v892, %v890
    %v937 = vpack.c.b16 %v895, %v893
    %v938 = vpack.c.b16 %v896, %v894
    %v939 = vpack.c.b16 %v899, %v897
    %v940 = vpack.c.b16 %v900, %v898
    %v941 = vpack.c.b16 %v903, %v901
    %v942 = vpack.c.b16 %v904, %v902
    %v943 = vpack.c.b16 %v907, %v905
    %v944 = vpack.c.b16 %v908, %v906
    %v945 = vpack.c.b16 %v911, %v909
    %v946 = vpack.c.b16 %v912, %v910
    %v947 = vpack.c.b16 %v915, %v913
    %v948 = vpack.c.b16 %v916, %v914
    %981 = vmatprep.subr.bf16.mxu0 0
    %982 = vmatpush1.bf16.msra.mxu0 %v613
    %983 = vmatprep.subr.bf16.mxu0 0
    %984 = vmatpush1.bf16.msra.mxu0 %v614
    %985 = vmatprep.subr.bf16.mxu0 0
    %986 = vmatpush1.bf16.msra.mxu0 %v615
    %987 = vmatprep.subr.bf16.mxu0 0
    %988 = vmatpush1.bf16.msra.mxu0 %v616
    %989 = vmatprep.subr.bf16.mxu0 0
    %990 = vmatpush1.bf16.msra.mxu0 %v617
    %991 = vmatprep.subr.bf16.mxu0 0
    %992 = vmatpush1.bf16.msra.mxu0 %v618
    %993 = vmatprep.subr.bf16.mxu0 0
    %994 = vmatpush1.bf16.msra.mxu0 %v619
    %995 = vmatprep.subr.bf16.mxu0 0
    %996 = vmatpush1.bf16.msra.mxu0 %v620
    %997 = vmatprep.subr.bf16.mxu0 0
    %998 = vmatpush1.bf16.msra.mxu0 %v621
    %999 = vmatprep.subr.bf16.mxu0 0
    %1000 = vmatpush1.bf16.msra.mxu0 %v622
    %1001 = vmatprep.subr.bf16.mxu0 0
    %1002 = vmatpush1.bf16.msra.mxu0 %v623
    %1003 = vmatprep.subr.bf16.mxu0 0
    %1004 = vmatpush1.bf16.msra.mxu0 %v624
    %1005 = vmatprep.subr.bf16.mxu0 0
    %1006 = vmatpush1.bf16.msra.mxu0 %v625
    %1007 = vmatprep.subr.bf16.mxu0 0
    %1008 = vmatpush1.bf16.msra.mxu0 %v626
    %1009 = vmatprep.subr.bf16.mxu0 0
    %1010 = vmatpush1.bf16.msra.mxu0 %v627
    %1011 = vmatprep.subr.bf16.mxu0 0
    %1012 = vmatpush1.bf16.msra.mxu0 %v628
    %1013 = vmatprep.mubr.bf16.mxu0 %v918
    %1014 = vmatmul.mubr.bf16.gmra.mrb[0].mxu0 %v917
    %v1015 = vpop.f32.mrb[0].mxu0
    %v1016 = vadd.f32 %v664, %v1015
    %v1017 = vpop.f32.mrb[0].mxu0
    %v1018 = vpop.f32.mrb[0].mxu0
    %v1019 = vadd.f32 %v669, %v1018
    %v1020 = vpop.f32.mrb[0].mxu0
    %1021 = vmatprep.mubr.bf16.mxu0 %v920
    %1022 = vmatmul.mubr.bf16.gmra.mrb[0].mxu0 %v919
    %v1023 = vpop.f32.mrb[0].mxu0
    %v1024 = vadd.f32 %v674, %v1023
    %v1025 = vpop.f32.mrb[0].mxu0
    %v1026 = vpop.f32.mrb[0].mxu0
    %v1027 = vadd.f32 %v679, %v1026
    %v1028 = vpop.f32.mrb[0].mxu0
    %1029 = vmatprep.mubr.bf16.mxu0 %v922
    %1030 = vmatmul.mubr.bf16.gmra.mrb[0].mxu0 %v921
    %v1031 = vpop.f32.mrb[0].mxu0
    %v1032 = vadd.f32 %v684, %v1031
    %v1033 = vpop.f32.mrb[0].mxu0
    %v1034 = vpop.f32.mrb[0].mxu0
    %v1035 = vadd.f32 %v689, %v1034
    %v1036 = vpop.f32.mrb[0].mxu0
    %1037 = vmatprep.mubr.bf16.mxu0 %v924
    %1038 = vmatmul.mubr.bf16.gmra.mrb[0].mxu0 %v923
    %v1039 = vpop.f32.mrb[0].mxu0
    %v1040 = vadd.f32 %v694, %v1039
    %v1041 = vpop.f32.mrb[0].mxu0
    %v1042 = vpop.f32.mrb[0].mxu0
    %v1043 = vadd.f32 %v699, %v1042
    %v1044 = vpop.f32.mrb[0].mxu0
    %1045 = vmatprep.mubr.bf16.mxu0 %v926
    %1046 = vmatmul.mubr.bf16.gmra.mrb[0].mxu0 %v925
    %v1047 = vpop.f32.mrb[0].mxu0
    %v1048 = vadd.f32 %v704, %v1047
    %v1049 = vpop.f32.mrb[0].mxu0
    %v1050 = vpop.f32.mrb[0].mxu0
    %v1051 = vadd.f32 %v709, %v1050
    %v1052 = vpop.f32.mrb[0].mxu0
    %1053 = vmatprep.mubr.bf16.mxu0 %v928
    %1054 = vmatmul.mubr.bf16.gmra.mrb[0].mxu0 %v927
    %v1055 = vpop.f32.mrb[0].mxu0
    %v1056 = vadd.f32 %v714, %v1055
    %v1057 = vpop.f32.mrb[0].mxu0
    %v1058 = vpop.f32.mrb[0].mxu0
    %v1059 = vadd.f32 %v719, %v1058
    %v1060 = vpop.f32.mrb[0].mxu0
    %1061 = vmatprep.mubr.bf16.mxu0 %v930
    %1062 = vmatmul.mubr.bf16.gmra.mrb[0].mxu0 %v929
    %v1063 = vpop.f32.mrb[0].mxu0
    %v1064 = vadd.f32 %v724, %v1063
    %v1065 = vpop.f32.mrb[0].mxu0
    %v1066 = vpop.f32.mrb[0].mxu0
    %v1067 = vadd.f32 %v729, %v1066
    %v1068 = vpop.f32.mrb[0].mxu0
    %1069 = vmatprep.mubr.bf16.mxu0 %v932
    %1070 = vmatmul.mubr.bf16.gmra.mrb[0].mxu0 %v931
    %v1071 = vpop.f32.mrb[0].mxu0
    %v1072 = vadd.f32 %v734, %v1071
    %v1073 = vpop.f32.mrb[0].mxu0
    %v1074 = vpop.f32.mrb[0].mxu0
    %v1075 = vadd.f32 %v739, %v1074
    %v1076 = vpop.f32.mrb[0].mxu0
    %1077 = vmatprep.mubr.bf16.mxu0 %v934
    %1078 = vmatmul.mubr.bf16.gmra.mrb[0].mxu0 %v933
    %v1079 = vpop.f32.mrb[0].mxu0
    %v1080 = vadd.f32 %v744, %v1079
    %v1081 = vpop.f32.mrb[0].mxu0
    %v1082 = vpop.f32.mrb[0].mxu0
    %v1083 = vadd.f32 %v749, %v1082
    %v1084 = vpop.f32.mrb[0].mxu0
    %1085 = vmatprep.mubr.bf16.mxu0 %v936
    %1086 = vmatmul.mubr.bf16.gmra.mrb[0].mxu0 %v935
    %v1087 = vpop.f32.mrb[0].mxu0
    %v1088 = vadd.f32 %v754, %v1087
    %v1089 = vpop.f32.mrb[0].mxu0
    %v1090 = vpop.f32.mrb[0].mxu0
    %v1091 = vadd.f32 %v759, %v1090
    %v1092 = vpop.f32.mrb[0].mxu0
    %1093 = vmatprep.mubr.bf16.mxu0 %v938
    %1094 = vmatmul.mubr.bf16.gmra.mrb[0].mxu0 %v937
    %v1095 = vpop.f32.mrb[0].mxu0
    %v1096 = vadd.f32 %v764, %v1095
    %v1097 = vpop.f32.mrb[0].mxu0
    %v1098 = vpop.f32.mrb[0].mxu0
    %v1099 = vadd.f32 %v769, %v1098
    %v1100 = vpop.f32.mrb[0].mxu0
    %1101 = vmatprep.mubr.bf16.mxu0 %v940
    %1102 = vmatmul.mubr.bf16.gmra.mrb[0].mxu0 %v939
    %v1103 = vpop.f32.mrb[0].mxu0
    %v1104 = vadd.f32 %v774, %v1103
    %v1105 = vpop.f32.mrb[0].mxu0
    %v1106 = vpop.f32.mrb[0].mxu0
    %v1107 = vadd.f32 %v779, %v1106
    %v1108 = vpop.f32.mrb[0].mxu0
    %1109 = vmatprep.mubr.bf16.mxu0 %v942
    %1110 = vmatmul.mubr.bf16.gmra.mrb[0].mxu0 %v941
    %v1111 = vpop.f32.mrb[0].mxu0
    %v1112 = vadd.f32 %v784, %v1111
    %v1113 = vpop.f32.mrb[0].mxu0
    %v1114 = vpop.f32.mrb[0].mxu0
    %v1115 = vadd.f32 %v789, %v1114
    %v1116 = vpop.f32.mrb[0].mxu0
    %1117 = vmatprep.mubr.bf16.mxu0 %v944
    %1118 = vmatmul.mubr.bf16.gmra.mrb[0].mxu0 %v943
    %v1119 = vpop.f32.mrb[0].mxu0
    %v1120 = vadd.f32 %v794, %v1119
    %v1121 = vpop.f32.mrb[0].mxu0
    %v1122 = vpop.f32.mrb[0].mxu0
    %v1123 = vadd.f32 %v799, %v1122
    %v1124 = vpop.f32.mrb[0].mxu0
    %1125 = vmatprep.mubr.bf16.mxu0 %v946
    %1126 = vmatmul.mubr.bf16.gmra.mrb[0].mxu0 %v945
    %v1127 = vpop.f32.mrb[0].mxu0
    %v1128 = vadd.f32 %v804, %v1127
    %v1129 = vpop.f32.mrb[0].mxu0
    %v1130 = vpop.f32.mrb[0].mxu0
    %v1131 = vadd.f32 %v809, %v1130
    %v1132 = vpop.f32.mrb[0].mxu0
    %1133 = vmatprep.mubr.bf16.mxu0 %v948
    %1134 = vmatmul.mubr.bf16.gmra.mrb[0].mxu0 %v947
    %v1135 = vpop.f32.mrb[0].mxu0
    %v1136 = vadd.f32 %v814, %v1135
    %v1137 = vpop.f32.mrb[0].mxu0
    %v1138 = vpop.f32.mrb[0].mxu0
    %v1139 = vadd.f32 %v819, %v1138
    %v1140 = vpop.f32.mrb[0].mxu0
    %1141 = vdwg.mxu0
    %v1142 = vmax.f32 %v1016, 0.0
    %v1143 = vmax.f32 %v1019, 0.0
    %v1144 = vmax.f32 %v1024, 0.0
    %v1145 = vmax.f32 %v1027, 0.0
    %v1146 = vmax.f32 %v1032, 0.0
    %v1147 = vmax.f32 %v1035, 0.0
    %v1148 = vmax.f32 %v1040, 0.0
    %v1149 = vmax.f32 %v1043, 0.0
    %v1150 = vmax.f32 %v1048, 0.0
    %v1151 = vmax.f32 %v1051, 0.0
    %v1152 = vmax.f32 %v1056, 0.0
    %v1153 = vmax.f32 %v1059, 0.0
    %v1154 = vmax.f32 %v1064, 0.0
    %v1155 = vmax.f32 %v1067, 0.0
    %v1156 = vmax.f32 %v1072, 0.0
    %v1157 = vmax.f32 %v1075, 0.0
    %v1158 = vmax.f32 %v1080, 0.0
    %v1159 = vmax.f32 %v1083, 0.0
    %v1160 = vmax.f32 %v1088, 0.0
    %v1161 = vmax.f32 %v1091, 0.0
    %v1162 = vmax.f32 %v1096, 0.0
    %v1163 = vmax.f32 %v1099, 0.0
    %v1164 = vmax.f32 %v1104, 0.0
    %v1165 = vmax.f32 %v1107, 0.0
    %v1166 = vmax.f32 %v1112, 0.0
    %v1167 = vmax.f32 %v1115, 0.0
    %v1168 = vmax.f32 %v1120, 0.0
    %v1169 = vmax.f32 %v1123, 0.0
    %v1170 = vmax.f32 %v1128, 0.0
    %v1171 = vmax.f32 %v1131, 0.0
    %v1172 = vmax.f32 %v1136, 0.0
    %v1173 = vmax.f32 %v1139, 0.0
    %v1174 = vld [vmem:[%s5] sm:$0xff]
    %v1175 = vld [vmem:[%s5 + $0x8] sm:$0xff]
    %v1176 = vld [vmem:[%s5 + $0x10] sm:$0xff]
    %v1177 = vld [vmem:[%s5 + $0x18] sm:$0xff]
    %v1178 = vld [vmem:[%s5 + $0x20] sm:$0xff]
    %v1179 = vld [vmem:[%s5 + $0x28] sm:$0xff]
    %v1180 = vld [vmem:[%s5 + $0x30] sm:$0xff]
    %v1181 = vld [vmem:[%s5 + $0x38] sm:$0xff]
    %v1182 = vld [vmem:[%s5 + $0x40] sm:$0xff]
    %v1183 = vld [vmem:[%s5 + $0x48] sm:$0xff]
    %v1184 = vld [vmem:[%s5 + $0x50] sm:$0xff]
    %v1185 = vld [vmem:[%s5 + $0x58] sm:$0xff]
    %v1186 = vld [vmem:[%s5 + $0x60] sm:$0xff]
    %v1187 = vld [vmem:[%s5 + $0x68] sm:$0xff]
    %v1188 = vld [vmem:[%s5 + $0x70] sm:$0xff]
    %v1189 = vld [vmem:[%s5 + $0x78] sm:$0xff]
    %v1190 = vld [vmem:[%s5 + $0x80] sm:$0xff]
    %v1191 = vld [vmem:[%s5 + $0x88] sm:$0xff]
    %v1192 = vld [vmem:[%s5 + $0x90] sm:$0xff]
    %v1193 = vld [vmem:[%s5 + $0x98] sm:$0xff]
    %v1194 = vld [vmem:[%s5 + $0xa0] sm:$0xff]
    %v1195 = vld [vmem:[%s5 + $0xa8] sm:$0xff]
    %v1196 = vld [vmem:[%s5 + $0xb0] sm:$0xff]
    %v1197 = vld [vmem:[%s5 + $0xb8] sm:$0xff]
    %v1198 = vld [vmem:[%s5 + $0xc0] sm:$0xff]
    %v1199 = vld [vmem:[%s5 + $0xc8] sm:$0xff]
    %v1200 = vld [vmem:[%s5 + $0xd0] sm:$0xff]
    %v1201 = vld [vmem:[%s5 + $0xd8] sm:$0xff]
    %v1202 = vld [vmem:[%s5 + $0xe0] sm:$0xff]
    %v1203 = vld [vmem:[%s5 + $0xe8] sm:$0xff]
    %v1204 = vld [vmem:[%s5 + $0xf0] sm:$0xff]
    %v1205 = vld [vmem:[%s5 + $0xf8] sm:$0xff]
    %1207 = vset.pattern.permute.xlu0 0
    %1208 = vperm.xlu0 %1207, %v1174
    %v1209 = vpop.permute.xlu0 %1208
    %1212 = vset.pattern.permute.xlu0 0
    %1213 = vperm.xlu0 %1212, %v1175
    %v1214 = vpop.permute.xlu0 %1213
    %1217 = vset.pattern.permute.xlu0 0
    %1218 = vperm.xlu0 %1217, %v1176
    %v1219 = vpop.permute.xlu0 %1218
    %1222 = vset.pattern.permute.xlu0 0
    %1223 = vperm.xlu0 %1222, %v1177
    %v1224 = vpop.permute.xlu0 %1223
    %1227 = vset.pattern.permute.xlu0 0
    %1228 = vperm.xlu0 %1227, %v1178
    %v1229 = vpop.permute.xlu0 %1228
    %1232 = vset.pattern.permute.xlu0 0
    %1233 = vperm.xlu0 %1232, %v1179
    %v1234 = vpop.permute.xlu0 %1233
    %1237 = vset.pattern.permute.xlu0 0
    %1238 = vperm.xlu0 %1237, %v1180
    %v1239 = vpop.permute.xlu0 %1238
    %1242 = vset.pattern.permute.xlu0 0
    %1243 = vperm.xlu0 %1242, %v1181
    %v1244 = vpop.permute.xlu0 %1243
    %1247 = vset.pattern.permute.xlu0 0
    %1248 = vperm.xlu0 %1247, %v1182
    %v1249 = vpop.permute.xlu0 %1248
    %1252 = vset.pattern.permute.xlu0 0
    %1253 = vperm.xlu0 %1252, %v1183
    %v1254 = vpop.permute.xlu0 %1253
    %1257 = vset.pattern.permute.xlu0 0
    %1258 = vperm.xlu0 %1257, %v1184
    %v1259 = vpop.permute.xlu0 %1258
    %1262 = vset.pattern.permute.xlu0 0
    %1263 = vperm.xlu0 %1262, %v1185
    %v1264 = vpop.permute.xlu0 %1263
    %1267 = vset.pattern.permute.xlu0 0
    %1268 = vperm.xlu0 %1267, %v1186
    %v1269 = vpop.permute.xlu0 %1268
    %1272 = vset.pattern.permute.xlu0 0
    %1273 = vperm.xlu0 %1272, %v1187
    %v1274 = vpop.permute.xlu0 %1273
    %1277 = vset.pattern.permute.xlu0 0
    %1278 = vperm.xlu0 %1277, %v1188
    %v1279 = vpop.permute.xlu0 %1278
    %1282 = vset.pattern.permute.xlu0 0
    %1283 = vperm.xlu0 %1282, %v1189
    %v1284 = vpop.permute.xlu0 %1283
    %1287 = vset.pattern.permute.xlu0 0
    %1288 = vperm.xlu0 %1287, %v1190
    %v1289 = vpop.permute.xlu0 %1288
    %1292 = vset.pattern.permute.xlu0 0
    %1293 = vperm.xlu0 %1292, %v1191
    %v1294 = vpop.permute.xlu0 %1293
    %1297 = vset.pattern.permute.xlu0 0
    %1298 = vperm.xlu0 %1297, %v1192
    %v1299 = vpop.permute.xlu0 %1298
    %1302 = vset.pattern.permute.xlu0 0
    %1303 = vperm.xlu0 %1302, %v1193
    %v1304 = vpop.permute.xlu0 %1303
    %1307 = vset.pattern.permute.xlu0 0
    %1308 = vperm.xlu0 %1307, %v1194
    %v1309 = vpop.permute.xlu0 %1308
    %1312 = vset.pattern.permute.xlu0 0
    %1313 = vperm.xlu0 %1312, %v1195
    %v1314 = vpop.permute.xlu0 %1313
    %1317 = vset.pattern.permute.xlu0 0
    %1318 = vperm.xlu0 %1317, %v1196
    %v1319 = vpop.permute.xlu0 %1318
    %1322 = vset.pattern.permute.xlu0 0
    %1323 = vperm.xlu0 %1322, %v1197
    %v1324 = vpop.permute.xlu0 %1323
    %1327 = vset.pattern.permute.xlu0 0
    %1328 = vperm.xlu0 %1327, %v1198
    %v1329 = vpop.permute.xlu0 %1328
    %1332 = vset.pattern.permute.xlu0 0
    %1333 = vperm.xlu0 %1332, %v1199
    %v1334 = vpop.permute.xlu0 %1333
    %1337 = vset.pattern.permute.xlu0 0
    %1338 = vperm.xlu0 %1337, %v1200
    %v1339 = vpop.permute.xlu0 %1338
    %1342 = vset.pattern.permute.xlu0 0
    %1343 = vperm.xlu0 %1342, %v1201
    %v1344 = vpop.permute.xlu0 %1343
    %1347 = vset.pattern.permute.xlu0 0
    %1348 = vperm.xlu0 %1347, %v1202
    %v1349 = vpop.permute.xlu0 %1348
    %1352 = vset.pattern.permute.xlu0 0
    %1353 = vperm.xlu0 %1352, %v1203
    %v1354 = vpop.permute.xlu0 %1353
    %1357 = vset.pattern.permute.xlu0 0
    %1358 = vperm.xlu0 %1357, %v1204
    %v1359 = vpop.permute.xlu0 %1358
    %1362 = vset.pattern.permute.xlu0 0
    %1363 = vperm.xlu0 %1362, %v1205
    %v1364 = vpop.permute.xlu0 %1363
    %v1366 = vmul.f32 %v1142, %v1209
    %v1367 = vmul.f32 %v1143, %v1214
    %v1368 = vmul.f32 %v1144, %v1219
    %v1369 = vmul.f32 %v1145, %v1224
    %v1370 = vmul.f32 %v1146, %v1229
    %v1371 = vmul.f32 %v1147, %v1234
    %v1372 = vmul.f32 %v1148, %v1239
    %v1373 = vmul.f32 %v1149, %v1244
    %v1374 = vmul.f32 %v1150, %v1249
    %v1375 = vmul.f32 %v1151, %v1254
    %v1376 = vmul.f32 %v1152, %v1259
    %v1377 = vmul.f32 %v1153, %v1264
    %v1378 = vmul.f32 %v1154, %v1269
    %v1379 = vmul.f32 %v1155, %v1274
    %v1380 = vmul.f32 %v1156, %v1279
    %v1381 = vmul.f32 %v1157, %v1284
    %v1382 = vmul.f32 %v1158, %v1289
    %v1383 = vmul.f32 %v1159, %v1294
    %v1384 = vmul.f32 %v1160, %v1299
    %v1385 = vmul.f32 %v1161, %v1304
    %v1386 = vmul.f32 %v1162, %v1309
    %v1387 = vmul.f32 %v1163, %v1314
    %v1388 = vmul.f32 %v1164, %v1319
    %v1389 = vmul.f32 %v1165, %v1324
    %v1390 = vmul.f32 %v1166, %v1329
    %v1391 = vmul.f32 %v1167, %v1334
    %v1392 = vmul.f32 %v1168, %v1339
    %v1393 = vmul.f32 %v1169, %v1344
    %v1394 = vmul.f32 %v1170, %v1349
    %v1395 = vmul.f32 %v1171, %v1354
    %v1396 = vmul.f32 %v1172, %v1359
    %v1397 = vmul.f32 %v1173, %v1364
    %v1398 = vadd.f32 %v1366, %v1367
    %v1399 = vadd.f32 %v1398, %v1368
    %v1400 = vadd.f32 %v1399, %v1369
    %v1401 = vadd.f32 %v1400, %v1370
    %v1402 = vadd.f32 %v1401, %v1371
    %v1403 = vadd.f32 %v1402, %v1372
    %v1404 = vadd.f32 %v1403, %v1373
    %v1405 = vadd.f32 %v1404, %v1374
    %v1406 = vadd.f32 %v1405, %v1375
    %v1407 = vadd.f32 %v1406, %v1376
    %v1408 = vadd.f32 %v1407, %v1377
    %v1409 = vadd.f32 %v1408, %v1378
    %v1410 = vadd.f32 %v1409, %v1379
    %v1411 = vadd.f32 %v1410, %v1380
    %v1412 = vadd.f32 %v1411, %v1381
    %v1413 = vadd.f32 %v1412, %v1382
    %v1414 = vadd.f32 %v1413, %v1383
    %v1415 = vadd.f32 %v1414, %v1384
    %v1416 = vadd.f32 %v1415, %v1385
    %v1417 = vadd.f32 %v1416, %v1386
    %v1418 = vadd.f32 %v1417, %v1387
    %v1419 = vadd.f32 %v1418, %v1388
    %v1420 = vadd.f32 %v1419, %v1389
    %v1421 = vadd.f32 %v1420, %v1390
    %v1422 = vadd.f32 %v1421, %v1391
    %v1423 = vadd.f32 %v1422, %v1392
    %v1424 = vadd.f32 %v1423, %v1393
    %v1425 = vadd.f32 %v1424, %v1394
    %v1426 = vadd.f32 %v1425, %v1395
    %v1427 = vadd.f32 %v1426, %v1396
    %v1428 = vadd.f32 %v1427, %v1397
    %v1429 = vrot.slane %v1428, 4
    %v1430 = vadd.f32 %v1428, %v1429
    %v1431 = vrot.slane %v1430, 2
    %v1432 = vadd.f32 %v1430, %v1431
    %v1433 = vrot.slane %v1432, 1
    %v1434 = vadd.f32 %v1432, %v1433
    %s1435 = sld [smem:[#allocation2]]
    %v1436 = vstv %s1435
    %v1437 = vadd.f32 %v1434, %v1436
    %1438 = vst [vmem:[#allocation3] sm:$0x1] %v1437
    // Predicated region
    $region30: #{tpu_custom_call.1} parent=1 // pred_check
      _
    $region31: #{tpu_custom_call.1} parent=1 // pred_check_branch
      %1440 = sbr.rel (0) target = $region33
    $region32: #{tpu_custom_call.1} parent=1 // pred_region
      %s1442 = ssub.s32 16, 16
      %1443 = vsyncadd [#allocation4], %s1442
      %s1445 = sshll.u32 [#allocation3], 4
      %s1446 = int_to_ptr.vmem [resolvable:$true] %s1445
      %1448 = dma.vmem_to_hbm [thread:$0]  %s1446, 16, %s7, [#allocation4]
    $region33: #{tpu_custom_call.1} parent=1 // pred_fallthru
      _
    // Predicated region
    $region34: #{tpu_custom_call.1} parent=1 // pred_check
      _
    $region35: #{tpu_custom_call.1} parent=1 // pred_check_branch
      %1450 = sbr.rel (0) target = $region37
    $region36: #{tpu_custom_call.1} parent=1 // pred_region
      %1451 = dma.done [#allocation4], 16
    $region37: #{tpu_custom_call.1} parent=1 // pred_fallthru
      _
    %1452 = vsyncpa [#allocation4], 1

</llo_original>
